<compile_context>
chip_gen: v7x
topology: tpu7x:2x2x1
jax: 0.10.0
libtpu: 0.0.40
codegen_flags: <defaults>
</compile_context>

<pallas_src>
import math

import jax
import jax.numpy as jnp
from jax.experimental import pallas as pl
from jax.experimental.pallas import tpu as pltpu


def _round_up(a: int, b: int) -> int:
    return (a + b - 1) // b * b


def _gcn_kernel(adj_ref, xw_ref, dinv_ref, bg_ref, wo_ref, bo_ref,
                h_ref, z_ref, acc_ref):
    """grid = (row_blocks, k_blocks); k (reduction over A columns) is last."""
    k = pl.program_id(1)

    @pl.when(k == 0)
    def _init():
        acc_ref[...] = jnp.zeros_like(acc_ref)

    # (tm, tk) bf16 @ (tk, 128) bf16 on the MXU, accumulated in f32.
    acc_ref[...] += jnp.dot(adj_ref[...], xw_ref[...],
                            preferred_element_type=jnp.float32)

    @pl.when(k == pl.num_programs(1) - 1)
    def _finalize():
        # Row-wise D^{-1/2} scaling + bias + ReLU  (GCNConv epilogue).
        h = jnp.maximum(acc_ref[...] * dinv_ref[...] + bg_ref[...], 0.0)
        h_ref[...] = h.astype(h_ref.dtype)
        # Linear(3, out_dim) on the lane-padded hidden dim.
        z = jnp.dot(h, wo_ref[...], preferred_element_type=jnp.float32) + bo_ref[...]
        z_ref[...] = z.astype(z_ref.dtype)


def gcn_forward(x, edge_index, wg, bg, wo, bo, *, tm=256, tk=512):
    """x: (N, input_dim) f32, edge_index: (2, E) int32 (row 0 = src, row 1 = dst)."""
    n, _ = x.shape
    hidden = wg.shape[1]
    out_dim = wo.shape[1]

    hp = _round_up(hidden, 128)        # lane-dense hidden width
    op = _round_up(out_dim, 128)       # lane-dense output width

    # Clamp tiles for small graphs; keep blocks (8,128)-legal.
    tm = min(tm, _round_up(n, 128))
    tk = min(tk, _round_up(n, 128))
    assert tm % 8 == 0 and tk % 128 == 0
    n_pad = _round_up(n, math.lcm(tm, tk))

    # ---- cheap glue in plain JAX (scatter / O(N*hidden) work only) ----
    loops = jnp.arange(n, dtype=edge_index.dtype)          # self loops as edges
    srcs = jnp.concatenate([edge_index[0], loops])
    dsts = jnp.concatenate([edge_index[1], loops])
    adj = jnp.zeros((n_pad, n_pad), jnp.float32).at[dsts, srcs].add(1.0)
    deg = adj.sum(axis=1)                                   # padded rows -> 0
    dinv = jnp.where(deg > 0, jax.lax.rsqrt(deg), 0.0)      # (n_pad,)

    # XW hoisted out of the A reduction; column D^{-1/2} folded in here.
    xw = x @ wg                                             # (n, hidden)
    xw_scaled = dinv[:n, None] * xw
    xw_pad = jnp.zeros((n_pad, hp), jnp.float32).at[:n, :hidden].set(xw_scaled)

    adj_bf = adj.astype(jnp.bfloat16)       # 0/1/2 edge counts: exact in bf16
    xw_bf = xw_pad.astype(jnp.bfloat16)
    dinv_col = dinv[:, None]                # (n_pad, 1) f32 row scaling

    bg_pad = jnp.zeros((1, hp), jnp.float32).at[:, :hidden].set(bg.reshape(1, hidden))
    wo_pad = jnp.zeros((hp, op), jnp.float32).at[:hidden, :out_dim].set(wo)
    bo_pad = jnp.zeros((1, op), jnp.float32).at[:, :out_dim].set(bo.reshape(1, out_dim))

    grid = (n_pad // tm, n_pad // tk)

    h_pad, z_pad = pl.pallas_call(
        _gcn_kernel,
        out_shape=(
            jax.ShapeDtypeStruct((n_pad, hp), jnp.float32),
            jax.ShapeDtypeStruct((n_pad, op), jnp.float32),
        ),
        grid_spec=pltpu.PrefetchScalarGridSpec(
            num_scalar_prefetch=0,
            grid=grid,
            in_specs=[
                pl.BlockSpec((tm, tk), lambda i, k: (i, k)),   # A_hat tile (bf16)
                pl.BlockSpec((tk, hp), lambda i, k: (k, 0)),   # scaled XW tile (bf16)
                pl.BlockSpec((tm, 1), lambda i, k: (i, 0)),    # row D^{-1/2} (f32)
                pl.BlockSpec((1, hp), lambda i, k: (0, 0)),    # bg   (resident)
                pl.BlockSpec((hp, op), lambda i, k: (0, 0)),   # Wo   (resident)
                pl.BlockSpec((1, op), lambda i, k: (0, 0)),    # bo   (resident)
            ],
            out_specs=(
                pl.BlockSpec((tm, hp), lambda i, k: (i, 0)),   # h (lane-dense)
                pl.BlockSpec((tm, op), lambda i, k: (i, 0)),   # z (lane-dense)
            ),
            scratch_shapes=[pltpu.VMEM((tm, hp), jnp.float32)],
        ),
        compiler_params=pltpu.CompilerParams(
            dimension_semantics=("parallel", "arbitrary")),
    )(adj_bf, xw_bf, dinv_col, bg_pad, wo_pad, bo_pad)

    return h_pad[:n, :hidden], z_pad[:n, :out_dim]


def init_params(key, input_dim, output_dim, hidden=3):
    """Deterministic synthetic params (GCNConv(input_dim,3) + Linear(3,output_dim))."""
    k1, k2, k3, k4 = jax.random.split(key, 4)
    # weights stored pre-transposed: (in, out), so the kernel does x @ W
    wg = jax.random.normal(k1, (input_dim, hidden), jnp.float32) * 0.3
    bg = jax.random.normal(k2, (1, hidden), jnp.float32) * 0.1
    wo = jax.random.normal(k3, (hidden, output_dim), jnp.float32) * 0.3
    bo = jax.random.normal(k4, (1, output_dim), jnp.float32) * 0.1
    return wg, bg, wo, bo


if __name__ == "__main__":
    key = jax.random.PRNGKey(0)
    kx, kp = jax.random.split(key)

    N, INPUT_DIM, OUTPUT_DIM = 200, 16, 4
    x = jax.random.normal(kx, (N, INPUT_DIM), jnp.float32)
    # deterministic ring graph (undirected: both directions listed)
    src = jnp.arange(N, dtype=jnp.int32)
    dst = (src + 1) % N
    edge_index = jnp.stack(
        [jnp.concatenate([src, dst]), jnp.concatenate([dst, src])], axis=0
    )

    wg, bg, wo, bo = init_params(kp, INPUT_DIM, OUTPUT_DIM)

    # tm=tk=128 -> n_pad=256, grid=(2, 2): exercises both the parallel row axis
    # and the k-accumulation / pl.when finalize path.
    h, z = gcn_forward(x, edge_index, wg, bg, wo, bo, tm=128, tk=128)
    jax.block_until_ready((h, z))

    # pure-JAX f32 reference (original module semantics)
    adj = jnp.zeros((N, N)).at[edge_index[1], edge_index[0]].add(1.0) + jnp.eye(N)
    deg = adj.sum(1)
    dinv = jnp.where(deg > 0, 1.0 / jnp.sqrt(deg), 0.0)
    a_norm = dinv[:, None] * adj * dinv[None, :]
    h_ref = jnp.maximum(a_norm @ (x @ wg) + bg, 0.0)
    z_ref = h_ref @ wo + bo

    # bf16 matmul inputs -> compare against f32 reference at bf16-level tolerance
    assert jnp.allclose(h, h_ref, atol=5e-2, rtol=5e-2), "h mismatch"
    assert jnp.allclose(z, z_ref, atol=5e-2, rtol=5e-2), "z mismatch"

    print("KERNEL_OK")
</pallas_src>

<mosaic_0001>
module attributes {stable_mosaic.version = 11 : i64} {
  func.func @_gcn_kernel(%arg0: i32, %arg1: i32, %arg2: memref<128x128xbf16, #tpu.memory_space<vmem>>, %arg3: memref<128x128xbf16, #tpu.memory_space<vmem>>, %arg4: memref<128x1xf32, #tpu.memory_space<vmem>>, %arg5: memref<1x128xf32, #tpu.memory_space<vmem>>, %arg6: memref<128x128xf32, #tpu.memory_space<vmem>>, %arg7: memref<1x128xf32, #tpu.memory_space<vmem>>, %arg8: memref<128x128xf32, #tpu.memory_space<vmem>>, %arg9: memref<128x128xf32, #tpu.memory_space<vmem>>, %arg10: memref<128x128xf32, #tpu.memory_space<vmem>>) attributes {dimension_semantics = [#tpu.dimension_semantics<parallel>, #tpu.dimension_semantics<arbitrary>], iteration_bounds = array<i64: 2, 2>, scalar_prefetch = 0 : i64, scratch_operands = 1 : i64, tpu.core_type = #tpu.core_type<tc>, window_params = [{transform_indices = @transform_0, window_bounds = array<i64: 128, 128>}, {transform_indices = @transform_1, window_bounds = array<i64: 128, 128>}, {transform_indices = @transform_2, window_bounds = array<i64: 128, 1>}, {pipeline_mode = #tpu.pipeline_mode<synchronous>, transform_indices = @transform_3, window_bounds = array<i64: 1, 128>}, {pipeline_mode = #tpu.pipeline_mode<synchronous>, transform_indices = @transform_4, window_bounds = array<i64: 128, 128>}, {pipeline_mode = #tpu.pipeline_mode<synchronous>, transform_indices = @transform_5, window_bounds = array<i64: 1, 128>}, {transform_indices = @transform_6, window_bounds = array<i64: 128, 128>}, {transform_indices = @transform_7, window_bounds = array<i64: 128, 128>}]} {
    %c0_i32 = arith.constant 0 : i32
    %0 = arith.cmpi eq, %arg1, %c0_i32 : i32
    %1 = arith.extui %0 : i1 to i32
    %c0_i32_0 = arith.constant 0 : i32
    %2 = arith.cmpi ne, %1, %c0_i32_0 : i32
    scf.if %2 {
      %cst_9 = arith.constant 0.000000e+00 : f32
      %12 = vector.broadcast %cst_9 : f32 to vector<128x128xf32>
      %c0_10 = arith.constant 0 : index
      %c0_11 = arith.constant 0 : index
      %13 = vector.load %arg10[%c0_10, %c0_11] : memref<128x128xf32, #tpu.memory_space<vmem>>, vector<128x128xf32>
      tpu.vector_store %arg10[%c0_10, %c0_11], %12 {strides = array<i32>} : memref<128x128xf32, #tpu.memory_space<vmem>>, vector<128x128xf32>,
    } else {
    }
    %c0 = arith.constant 0 : index
    %c0_1 = arith.constant 0 : index
    %3 = vector.load %arg10[%c0, %c0_1] : memref<128x128xf32, #tpu.memory_space<vmem>>, vector<128x128xf32>
    %c0_2 = arith.constant 0 : index
    %c0_3 = arith.constant 0 : index
    %4 = vector.load %arg2[%c0_2, %c0_3] : memref<128x128xbf16, #tpu.memory_space<vmem>>, vector<128x128xbf16>
    %c0_4 = arith.constant 0 : index
    %c0_5 = arith.constant 0 : index
    %5 = vector.load %arg3[%c0_4, %c0_5] : memref<128x128xbf16, #tpu.memory_space<vmem>>, vector<128x128xbf16>
    %cst = arith.constant dense<0.000000e+00> : vector<128x128xf32>
    %6 = tpu.matmul %4, %5, %cst {dimension_numbers = #tpu.dot_dimension_numbers<[1], [0], [0], [1], [0, 0, 1, 1], [], []>} : vector<128x128xbf16>, vector<128x128xbf16>, vector<128x128xf32> -> vector<128x128xf32>
    %7 = arith.addf %3, %6 : vector<128x128xf32>
    %c0_6 = arith.constant 0 : index
    %c0_7 = arith.constant 0 : index
    %8 = vector.load %arg10[%c0_6, %c0_7] : memref<128x128xf32, #tpu.memory_space<vmem>>, vector<128x128xf32>
    tpu.vector_store %arg10[%c0_6, %c0_7], %7 {strides = array<i32>} : memref<128x128xf32, #tpu.memory_space<vmem>>, vector<128x128xf32>,
    %c1_i32 = arith.constant 1 : i32
    %9 = arith.cmpi eq, %arg1, %c1_i32 : i32
    %10 = arith.extui %9 : i1 to i32
    %c0_i32_8 = arith.constant 0 : i32
    %11 = arith.cmpi ne, %10, %c0_i32_8 : i32
    scf.if %11 {
      %c0_9 = arith.constant 0 : index
      %c0_10 = arith.constant 0 : index
      %12 = vector.load %arg10[%c0_9, %c0_10] : memref<128x128xf32, #tpu.memory_space<vmem>>, vector<128x128xf32>
      %c0_11 = arith.constant 0 : index
      %c0_12 = arith.constant 0 : index
      %13 = vector.load %arg4[%c0_11, %c0_12] : memref<128x1xf32, #tpu.memory_space<vmem>>, vector<128x1xf32>
      %14 = vector.broadcast %13 : vector<128x1xf32> to vector<128x128xf32>
      %15 = arith.mulf %12, %14 : vector<128x128xf32>
      %c0_13 = arith.constant 0 : index
      %c0_14 = arith.constant 0 : index
      %16 = vector.load %arg5[%c0_13, %c0_14] : memref<1x128xf32, #tpu.memory_space<vmem>>, vector<1x128xf32>
      %17 = vector.broadcast %16 : vector<1x128xf32> to vector<128x128xf32>
      %18 = arith.addf %15, %17 : vector<128x128xf32>
      %cst_15 = arith.constant 0.000000e+00 : f32
      %19 = vector.broadcast %cst_15 : f32 to vector<128x128xf32>
      %20 = arith.maximumf %18, %19 : vector<128x128xf32>
      %c0_16 = arith.constant 0 : index
      %c0_17 = arith.constant 0 : index
      %21 = vector.load %arg8[%c0_16, %c0_17] : memref<128x128xf32, #tpu.memory_space<vmem>>, vector<128x128xf32>
      tpu.vector_store %arg8[%c0_16, %c0_17], %20 {strides = array<i32>} : memref<128x128xf32, #tpu.memory_space<vmem>>, vector<128x128xf32>,
      %c0_18 = arith.constant 0 : index
      %c0_19 = arith.constant 0 : index
      %22 = vector.load %arg6[%c0_18, %c0_19] : memref<128x128xf32, #tpu.memory_space<vmem>>, vector<128x128xf32>
      %cst_20 = arith.constant dense<0.000000e+00> : vector<128x128xf32>
      %23 = tpu.matmul %20, %22, %cst_20 {dimension_numbers = #tpu.dot_dimension_numbers<[1], [0], [0], [1], [0, 0, 1, 1], [], []>} : vector<128x128xf32>, vector<128x128xf32>, vector<128x128xf32> -> vector<128x128xf32>
      %c0_21 = arith.constant 0 : index
      %c0_22 = arith.constant 0 : index
      %24 = vector.load %arg7[%c0_21, %c0_22] : memref<1x128xf32, #tpu.memory_space<vmem>>, vector<1x128xf32>
      %25 = vector.broadcast %24 : vector<1x128xf32> to vector<128x128xf32>
      %26 = arith.addf %23, %25 : vector<128x128xf32>
      %c0_23 = arith.constant 0 : index
      %c0_24 = arith.constant 0 : index
      %27 = vector.load %arg9[%c0_23, %c0_24] : memref<128x128xf32, #tpu.memory_space<vmem>>, vector<128x128xf32>
      tpu.vector_store %arg9[%c0_23, %c0_24], %26 {strides = array<i32>} : memref<128x128xf32, #tpu.memory_space<vmem>>, vector<128x128xf32>,
    } else {
    }
    return
  }
  func.func @transform_0(%arg0: i32, %arg1: i32) -> (i32, i32) {
    %c0_i32 = arith.constant 0 : i32
    return %arg0, %arg1 : i32, i32
  }
  func.func @transform_1(%arg0: i32, %arg1: i32) -> (i32, i32) {
    %c0_i32 = arith.constant 0 : i32
    %c0_i32_0 = arith.constant 0 : i32
    return %arg1, %c0_i32 : i32, i32
  }
  func.func @transform_2(%arg0: i32, %arg1: i32) -> (i32, i32) {
    %c0_i32 = arith.constant 0 : i32
    %c0_i32_0 = arith.constant 0 : i32
    return %arg0, %c0_i32 : i32, i32
  }
  func.func @transform_3(%arg0: i32, %arg1: i32) -> (i32, i32) {
    %c0_i32 = arith.constant 0 : i32
    %c0_i32_0 = arith.constant 0 : i32
    %c0_i32_1 = arith.constant 0 : i32
    return %c0_i32, %c0_i32_0 : i32, i32
  }
  func.func @transform_4(%arg0: i32, %arg1: i32) -> (i32, i32) {
    %c0_i32 = arith.constant 0 : i32
    %c0_i32_0 = arith.constant 0 : i32
    %c0_i32_1 = arith.constant 0 : i32
    return %c0_i32, %c0_i32_0 : i32, i32
  }
  func.func @transform_5(%arg0: i32, %arg1: i32) -> (i32, i32) {
    %c0_i32 = arith.constant 0 : i32
    %c0_i32_0 = arith.constant 0 : i32
    %c0_i32_1 = arith.constant 0 : i32
    return %c0_i32, %c0_i32_0 : i32, i32
  }
  func.func @transform_6(%arg0: i32, %arg1: i32) -> (i32, i32) {
    %c0_i32 = arith.constant 0 : i32
    %c0_i32_0 = arith.constant 0 : i32
    return %arg0, %c0_i32 : i32, i32
  }
  func.func @transform_7(%arg0: i32, %arg1: i32) -> (i32, i32) {
    %c0_i32 = arith.constant 0 : i32
    %c0_i32_0 = arith.constant 0 : i32
    return %arg0, %c0_i32 : i32, i32
  }
}

</mosaic_0001>

<llo_original>
// kernel: tpu_custom_call.1
$region0: #{tpu_custom_call.1}
  #allocation0 [shape = 'u32[]', space=smem, size = 0x4, offset = 0x4, fixed_abs, tag = 'smem constant byte address 0x4 - core index']
  #allocation1 [shape = 'u32[144,128]{1,0:T(1,128)}', space=vmem, size = 0x12000, scoped, tag = 'internal scratch']
  #allocation2 [shape = 'f32[128,128]{1,0:T(8,128)}', space=vmem, size = 0x10000, scoped, tag = 'scratch operand']
  %s0 = inlined_call_operand.vmem [shape: bf16[256,256], index: 0, kind: input, shape index: {}]
  %s1 = inlined_call_operand.hbm [shape: bf16[256,128], index: 1, kind: input, shape index: {}]
  %s2 = inlined_call_operand.vmem [shape: f32[256,1], index: 2, kind: input, shape index: {}]
  %s3 = inlined_call_operand.vmem [shape: f32[1,128], index: 3, kind: input, shape index: {}]
  %s4 = inlined_call_operand.hbm [shape: f32[128,128], index: 4, kind: input, shape index: {}]
  %s5 = inlined_call_operand.vmem [shape: f32[1,128], index: 5, kind: input, shape index: {}]
  %s6 = inlined_call_operand.hbm [shape: f32[256,128], index: 6, kind: output, shape index: {0}]
  %s7 = inlined_call_operand.hbm [shape: f32[256,128], index: 7, kind: output, shape index: {1}]
  %8 = xla_tuple %s6, %s7
  %s9 = sld [smem:[#allocation0]]
  $region122: #{tpu_custom_call.1} parent=0
    _
  %s11 = ssub.s32 1, %s9
  %s12 = scalar_select 0, %s11, %s9
  $region1: #{tpu_custom_call.1} parent=0
    #allocation3 [shape = 'u8[65536]{0}', space=vmem, size = 0x10000, scoped, tag = 'input window, operand 0']
    #allocation4 [shape = 'u8[65536]{0}', space=vmem, size = 0x10000, scoped, tag = 'input window, operand 1']
    #allocation5 [shape = 's32[2]{0}', space=sflag, size = 0x8, scoped, tag = 'scoped memory for tpu_custom_call.1']
    #allocation6 [shape = 's32[2]{0}', space=sflag, size = 0x8, scoped, tag = 'scoped memory for tpu_custom_call.1']
    #allocation7 [shape = 'u8[65536]{0}', space=vmem, size = 0x10000, scoped, tag = 'input window, operand 4, single buffered']
    #allocation8 [shape = 's32[1]{0}', space=sflag, size = 0x4, scoped, tag = 'scoped memory for tpu_custom_call.1']
    #allocation9 [shape = 'u8[131072]{0}', space=vmem, size = 0x20000, scoped, tag = 'output window, operand 0']
    #allocation10 [shape = 'u8[131072]{0}', space=vmem, size = 0x20000, scoped, tag = 'output window, operand 1']
    #allocation11 [shape = 's32[2]{0}', space=sflag, size = 0x8, scoped, tag = 'scoped memory for tpu_custom_call.1']
    %13 = vsyncpa [#allocation5], 0
    %s14 = scalar_lea.sflag [#allocation5], 1
    %15 = vsyncpa %s14, 0
    %16 = vsyncpa [#allocation8], 0
    %17 = vsyncpa [#allocation6], 0
    %s18 = scalar_lea.sflag [#allocation6], 1
    %19 = vsyncpa %s18, 0
    %20 = vsyncpa [#allocation11], 0
    %s21 = scalar_lea.sflag [#allocation11], 1
    %22 = vsyncpa %s21, 0
    loop: start=0, step=1, limit=6
    $region2: #{tpu_custom_call.1} parent=1 // loop_pre_header
      _
    $region3: #{tpu_custom_call.1} parent=1 // loop_header
      %s24 = sphi 0, %s28
      %p25 = scmp.ge.s32.totalorder %s24, 6
      %s31 = sphi 0, %s43
      %s32 = sphi 0, %s39
      %s33 = sphi 0, %s31
      %s34 = sphi 0, %s32
      %s35 = sphi 0, %s33
      %s36 = sphi 0, %s34
      %s48 = sphi 0, %s50
      %s51 = sphi 0, %s48
      %s52 = sphi 0, %s51
      %s68 = sphi 0, %s52
      %s74 = sphi 0, %s76
      %s77 = sphi 0, %s74
      %s78 = sphi 0, %s77
      %s94 = sphi 0, %s78
      %s100 = sphi 0, %s102
      %s103 = sphi 0, %s100
      %s104 = sphi 0, %s103
      %s120 = sphi 0, %s104
      %s124 = sphi 0, %s124
      %s126 = sphi 0, %s124
      %s127 = sphi 0, %s126
      %s141 = sphi 0, %s127
      %s145 = sphi 0, %s145
      %s147 = sphi 0, %s145
      %s148 = sphi 0, %s147
      %s162 = sphi 0, %s148
      %s166 = sphi 0, %s166
      %s168 = sphi 0, %s166
      %s169 = sphi 0, %s168
      %s183 = sphi 0, %s169
      %s189 = sphi 0, %s191
      %s192 = sphi 0, %s189
      %s193 = sphi 0, %s192
      %s209 = sphi 0, %s193
      %s215 = sphi 0, %s217
      %s218 = sphi 0, %s215
      %s219 = sphi 0, %s218
      %s235 = sphi 0, %s219
    $region4: #{tpu_custom_call.1} parent=1 // loop_header_branch
      %27 = sbr.rel (%p25) target = $region8
    $region5: #{tpu_custom_call.1} parent=1 // loop_body
      %s29 = ssub.s32 %s24, 1
      %s30 = ssub.s32 %s24, 2
      %s37 = sadd.s32 1, %s32
      %p38 = scmp.ge.s32.totalorder %s37, 2
      %s39 = scalar_select %p38, 0, %s37
      %s40 = sadd.s32 1, %s31
      %s41 = scalar_select %p38, %s40, %s31
      %p42 = scmp.ge.s32.totalorder %s41, 2
      %s43 = scalar_select %p42, 0, %s41
      %s44 = ssub.s32 %s31, %s43
      %s45 = ssub.s32 %s32, %s39
      %s46 = sor.u32 %s44, %s45
      %p47 = scmp.eq.s32.totalorder %s46, 0
      %s49 = sadd.s32 %s48, 1
      %s50 = scalar_select %p47, %s48, %s49
      %p53 = pneg %p47
      %p54 = scmp.eq.s32.totalorder %s24, 3
      %p55 = por %p53, %p54
      %p56 = scmp.ne.s32.totalorder %s48, %s51
      %p57 = scmp.eq.s32.totalorder %s24, 0
      %p58 = por %p56, %p57
      %p59 = scmp.ne.s32.totalorder %s48, %s51
      %p60 = scmp.eq.s32.totalorder %s29, 3
      %p61 = por %p59, %p60
      %p62 = scmp.ne.s32.totalorder %s51, %s52
      %p63 = scmp.eq.s32.totalorder %s29, 0
      %p64 = por %p62, %p63
      %p65 = scmp.ne.s32.totalorder %s51, %s52
      %p66 = scmp.eq.s32.totalorder %s30, 3
      %p67 = por %p65, %p66
      %p69 = scmp.ne.s32.totalorder %s52, %s68
      %p70 = scmp.eq.s32.totalorder %s30, 0
      %p71 = por %p69, %p70
      %s72 = ssub.s32 %s32, %s39
      %p73 = scmp.eq.s32.totalorder %s72, 0
      %s75 = sadd.s32 %s74, 1
      %s76 = scalar_select %p73, %s74, %s75
      %p79 = pneg %p73
      %p80 = scmp.eq.s32.totalorder %s24, 3
      %p81 = por %p79, %p80
      %p82 = scmp.ne.s32.totalorder %s74, %s77
      %p83 = scmp.eq.s32.totalorder %s24, 0
      %p84 = por %p82, %p83
      %p85 = scmp.ne.s32.totalorder %s74, %s77
      %p86 = scmp.eq.s32.totalorder %s29, 3
      %p87 = por %p85, %p86
      %p88 = scmp.ne.s32.totalorder %s77, %s78
      %p89 = scmp.eq.s32.totalorder %s29, 0
      %p90 = por %p88, %p89
      %p91 = scmp.ne.s32.totalorder %s77, %s78
      %p92 = scmp.eq.s32.totalorder %s30, 3
      %p93 = por %p91, %p92
      %p95 = scmp.ne.s32.totalorder %s78, %s94
      %p96 = scmp.eq.s32.totalorder %s30, 0
      %p97 = por %p95, %p96
      %s98 = ssub.s32 %s31, %s43
      %p99 = scmp.eq.s32.totalorder %s98, 0
      %s101 = sadd.s32 %s100, 1
      %s102 = scalar_select %p99, %s100, %s101
      %p105 = pneg %p99
      %p106 = scmp.eq.s32.totalorder %s24, 3
      %p107 = por %p105, %p106
      %p108 = scmp.ne.s32.totalorder %s100, %s103
      %p109 = scmp.eq.s32.totalorder %s24, 0
      %p110 = por %p108, %p109
      %p111 = scmp.ne.s32.totalorder %s100, %s103
      %p112 = scmp.eq.s32.totalorder %s29, 3
      %p113 = por %p111, %p112
      %p114 = scmp.ne.s32.totalorder %s103, %s104
      %p115 = scmp.eq.s32.totalorder %s29, 0
      %p116 = por %p114, %p115
      %p117 = scmp.ne.s32.totalorder %s103, %s104
      %p118 = scmp.eq.s32.totalorder %s30, 3
      %p119 = por %p117, %p118
      %p121 = scmp.ne.s32.totalorder %s104, %s120
      %p122 = scmp.eq.s32.totalorder %s30, 0
      %p123 = por %p121, %p122
      %s125 = sadd.s32 %s124, 1
      %p128 = scmp.eq.s32.totalorder %s24, 3
      %p129 = scmp.ne.s32.totalorder %s124, %s126
      %p130 = scmp.eq.s32.totalorder %s24, 0
      %p131 = por %p129, %p130
      %p132 = scmp.ne.s32.totalorder %s124, %s126
      %p133 = scmp.eq.s32.totalorder %s29, 3
      %p134 = por %p132, %p133
      %p135 = scmp.ne.s32.totalorder %s126, %s127
      %p136 = scmp.eq.s32.totalorder %s29, 0
      %p137 = por %p135, %p136
      %p138 = scmp.ne.s32.totalorder %s126, %s127
      %p139 = scmp.eq.s32.totalorder %s30, 3
      %p140 = por %p138, %p139
      %p142 = scmp.ne.s32.totalorder %s127, %s141
      %p143 = scmp.eq.s32.totalorder %s30, 0
      %p144 = por %p142, %p143
      %s146 = sadd.s32 %s145, 1
      %p149 = scmp.eq.s32.totalorder %s24, 3
      %p150 = scmp.ne.s32.totalorder %s145, %s147
      %p151 = scmp.eq.s32.totalorder %s24, 0
      %p152 = por %p150, %p151
      %p153 = scmp.ne.s32.totalorder %s145, %s147
      %p154 = scmp.eq.s32.totalorder %s29, 3
      %p155 = por %p153, %p154
      %p156 = scmp.ne.s32.totalorder %s147, %s148
      %p157 = scmp.eq.s32.totalorder %s29, 0
      %p158 = por %p156, %p157
      %p159 = scmp.ne.s32.totalorder %s147, %s148
      %p160 = scmp.eq.s32.totalorder %s30, 3
      %p161 = por %p159, %p160
      %p163 = scmp.ne.s32.totalorder %s148, %s162
      %p164 = scmp.eq.s32.totalorder %s30, 0
      %p165 = por %p163, %p164
      %s167 = sadd.s32 %s166, 1
      %p170 = scmp.eq.s32.totalorder %s24, 3
      %p171 = scmp.ne.s32.totalorder %s166, %s168
      %p172 = scmp.eq.s32.totalorder %s24, 0
      %p173 = por %p171, %p172
      %p174 = scmp.ne.s32.totalorder %s166, %s168
      %p175 = scmp.eq.s32.totalorder %s29, 3
      %p176 = por %p174, %p175
      %p177 = scmp.ne.s32.totalorder %s168, %s169
      %p178 = scmp.eq.s32.totalorder %s29, 0
      %p179 = por %p177, %p178
      %p180 = scmp.ne.s32.totalorder %s168, %s169
      %p181 = scmp.eq.s32.totalorder %s30, 3
      %p182 = por %p180, %p181
      %p184 = scmp.ne.s32.totalorder %s169, %s183
      %p185 = scmp.eq.s32.totalorder %s30, 0
      %p186 = por %p184, %p185
      %s187 = ssub.s32 %s31, %s43
      %p188 = scmp.eq.s32.totalorder %s187, 0
      %s190 = sadd.s32 %s189, 1
      %s191 = scalar_select %p188, %s189, %s190
      %p194 = pneg %p188
      %p195 = scmp.eq.s32.totalorder %s24, 3
      %p196 = por %p194, %p195
      %p197 = scmp.ne.s32.totalorder %s189, %s192
      %p198 = scmp.eq.s32.totalorder %s24, 0
      %p199 = por %p197, %p198
      %p200 = scmp.ne.s32.totalorder %s189, %s192
      %p201 = scmp.eq.s32.totalorder %s29, 3
      %p202 = por %p200, %p201
      %p203 = scmp.ne.s32.totalorder %s192, %s193
      %p204 = scmp.eq.s32.totalorder %s29, 0
      %p205 = por %p203, %p204
      %p206 = scmp.ne.s32.totalorder %s192, %s193
      %p207 = scmp.eq.s32.totalorder %s30, 3
      %p208 = por %p206, %p207
      %p210 = scmp.ne.s32.totalorder %s193, %s209
      %p211 = scmp.eq.s32.totalorder %s30, 0
      %p212 = por %p210, %p211
      %s213 = ssub.s32 %s31, %s43
      %p214 = scmp.eq.s32.totalorder %s213, 0
      %s216 = sadd.s32 %s215, 1
      %s217 = scalar_select %p214, %s215, %s216
      %p220 = pneg %p214
      %p221 = scmp.eq.s32.totalorder %s24, 3
      %p222 = por %p220, %p221
      %p223 = scmp.ne.s32.totalorder %s215, %s218
      %p224 = scmp.eq.s32.totalorder %s24, 0
      %p225 = por %p223, %p224
      %p226 = scmp.ne.s32.totalorder %s215, %s218
      %p227 = scmp.eq.s32.totalorder %s29, 3
      %p228 = por %p226, %p227
      %p229 = scmp.ne.s32.totalorder %s218, %s219
      %p230 = scmp.eq.s32.totalorder %s29, 0
      %p231 = por %p229, %p230
      %p232 = scmp.ne.s32.totalorder %s218, %s219
      %p233 = scmp.eq.s32.totalorder %s30, 3
      %p234 = por %p232, %p233
      %p236 = scmp.ne.s32.totalorder %s219, %s235
      %p237 = scmp.eq.s32.totalorder %s30, 0
      %p238 = por %p236, %p237
      %p239 = scmp.le.s32.totalorder 1, %s24
      %p240 = scmp.lt.s32.totalorder %s24, 5
      %p241 = pnand %p239, %p240
      %p242 = pneg %p241
      // Predicated region
      $region9: #{tpu_custom_call.1} parent=5 // pred_check
        _
      $region10: #{tpu_custom_call.1} parent=5 // pred_check_branch
        %244 = sbr.rel (%p241) target = $region12
      $region11: #{tpu_custom_call.1} parent=5 // pred_region
        %s245 = ssub.s32 %s24, 1
        // Predicated region
        $region13: #{tpu_custom_call.1} parent=11 // pred_check
          %p246 = pneg %p137
        $region14: #{tpu_custom_call.1} parent=11 // pred_check_branch
          %248 = sbr.rel (%p246) target = $region16
        $region15: #{tpu_custom_call.1} parent=11 // pred_region
          _
        $region16: #{tpu_custom_call.1} parent=11 // pred_fallthru
          _
        // Predicated region
        $region17: #{tpu_custom_call.1} parent=11 // pred_check
          %p249 = pneg %p158
        $region18: #{tpu_custom_call.1} parent=11 // pred_check_branch
          %251 = sbr.rel (%p249) target = $region20
        $region19: #{tpu_custom_call.1} parent=11 // pred_region
          %s253 = ssub.s32 2048, 2048
          %254 = vsyncadd [#allocation8], %s253
          %s255 = sshll.u32 [#allocation7], 4
          %s256 = int_to_ptr.vmem [resolvable:$true] %s255
          %261 = dma.hbm_to_vmem [thread:$0]  %s4, 2048, %s256, [#allocation8], 128, 128, 8
        $region20: #{tpu_custom_call.1} parent=11 // pred_fallthru
          _
        // Predicated region
        $region21: #{tpu_custom_call.1} parent=11 // pred_check
          %p262 = pneg %p179
        $region22: #{tpu_custom_call.1} parent=11 // pred_check_branch
          %264 = sbr.rel (%p262) target = $region24
        $region23: #{tpu_custom_call.1} parent=11 // pred_region
          _
        $region24: #{tpu_custom_call.1} parent=11 // pred_fallthru
          _
      $region12: #{tpu_custom_call.1} parent=5 // pred_fallthru
        _
      %p265 = scmp.lt.s32.totalorder %s24, 4
      // Predicated region
      $region25: #{tpu_custom_call.1} parent=5 // pred_check
        %p266 = pneg %p265
      $region26: #{tpu_custom_call.1} parent=5 // pred_check_branch
        %268 = sbr.rel (%p266) target = $region28
      $region27: #{tpu_custom_call.1} parent=5 // pred_region
        // Predicated region
        $region29: #{tpu_custom_call.1} parent=27 // pred_check
          %p269 = pneg %p58
        $region30: #{tpu_custom_call.1} parent=27 // pred_check_branch
          %271 = sbr.rel (%p269) target = $region32
        $region31: #{tpu_custom_call.1} parent=27 // pred_region
          %s272 = sand.u32 %s48, 1
          %s273 = sand.u32 %s48, 1
          %s274 = smul.addr %s273, 64
          %s275 = scalar_lea.vmem [#allocation3], %s274
          %s276 = smul.u32 16, %s31
          %s277 = smul.addr %s276, 2
          %s278 = sadd.s32 %s32, %s277
          %s279 = smul.addr %s278, 4
          %s280 = scalar_lea.vmem %s0, %s279
          // Predicated region
          $region33: #{tpu_custom_call.1} parent=31 // pred_check
            _
          $region34: #{tpu_custom_call.1} parent=31 // pred_check_branch
            %282 = sbr.rel (0) target = $region36
          $region35: #{tpu_custom_call.1} parent=31 // pred_region
            // Predicated region
            $region37: #{tpu_custom_call.1} parent=35 // pred_check
              _
            $region38: #{tpu_custom_call.1} parent=35 // pred_check_branch
              %284 = sbr.rel target = $region40
            $region39: #{tpu_custom_call.1} parent=35 // pred_region
              // Predicated region
              $region52: #{tpu_custom_call.1} parent=39 // pred_check
                _
              $region53: #{tpu_custom_call.1} parent=39 // pred_check_branch
                %329 = sbr.rel (0) target = $region55
              $region54: #{tpu_custom_call.1} parent=39 // pred_region
                loop: start=0, step=1, limit=1
                $region56: #{tpu_custom_call.1} parent=54 // loop_pre_header
                  _
                $region57: #{tpu_custom_call.1} parent=54 // loop_header
                  %s331 = sphi 0, %s335
                  %p332 = scmp.ge.s32.totalorder %s331, 1
                  %s336 = sphi %s280, %s280
                  %s337 = sphi %s275, %s275
                $region58: #{tpu_custom_call.1} parent=54 // loop_header_branch
                  %334 = sbr.rel (%p332) target = $region62
                $region59: #{tpu_custom_call.1} parent=54 // loop_body
                  _
                $region60: #{tpu_custom_call.1} parent=54 // loop_footer
                  %s335 = sadd.s32 1, %s331
                $region61: #{tpu_custom_call.1} parent=54 // loop_footer_branch
                  %330 = sbr.rel target = $region57
                $region62: #{tpu_custom_call.1} parent=54 // loop_exit
                  _
                loop: start=0, step=1, limit=1
                $region63: #{tpu_custom_call.1} parent=54 // loop_pre_header
                  _
                $region64: #{tpu_custom_call.1} parent=54 // loop_header
                  %s340 = sphi 0, %s344
                  %p341 = scmp.ge.s32.totalorder %s340, 1
                  %s345 = sphi %s280, %s280
                  %s346 = sphi %s275, %s275
                $region65: #{tpu_custom_call.1} parent=54 // loop_header_branch
                  %343 = sbr.rel (%p341) target = $region69
                $region66: #{tpu_custom_call.1} parent=54 // loop_body
                  %v347 = vld [vmem:[%s345] sm:$0xf]
                  %348 = vst [vmem:[%s346] sm:$0xf] %v347
                  %v349 = vld [vmem:[%s345 + $0x8] sm:$0xf]
                  %350 = vst [vmem:[%s346 + $0x4] sm:$0xf] %v349
                  %v351 = vld [vmem:[%s345 + $0x10] sm:$0xf]
                  %352 = vst [vmem:[%s346 + $0x8] sm:$0xf] %v351
                  %v353 = vld [vmem:[%s345 + $0x18] sm:$0xf]
                  %354 = vst [vmem:[%s346 + $0xc] sm:$0xf] %v353
                  %v355 = vld [vmem:[%s345 + $0x20] sm:$0xf]
                  %356 = vst [vmem:[%s346 + $0x10] sm:$0xf] %v355
                  %v357 = vld [vmem:[%s345 + $0x28] sm:$0xf]
                  %358 = vst [vmem:[%s346 + $0x14] sm:$0xf] %v357
                  %v359 = vld [vmem:[%s345 + $0x30] sm:$0xf]
                  %360 = vst [vmem:[%s346 + $0x18] sm:$0xf] %v359
                  %v361 = vld [vmem:[%s345 + $0x38] sm:$0xf]
                  %362 = vst [vmem:[%s346 + $0x1c] sm:$0xf] %v361
                  %v363 = vld [vmem:[%s345 + $0x40] sm:$0xf]
                  %364 = vst [vmem:[%s346 + $0x20] sm:$0xf] %v363
                  %v365 = vld [vmem:[%s345 + $0x48] sm:$0xf]
                  %366 = vst [vmem:[%s346 + $0x24] sm:$0xf] %v365
                  %v367 = vld [vmem:[%s345 + $0x50] sm:$0xf]
                  %368 = vst [vmem:[%s346 + $0x28] sm:$0xf] %v367
                  %v369 = vld [vmem:[%s345 + $0x58] sm:$0xf]
                  %370 = vst [vmem:[%s346 + $0x2c] sm:$0xf] %v369
                  %v371 = vld [vmem:[%s345 + $0x60] sm:$0xf]
                  %372 = vst [vmem:[%s346 + $0x30] sm:$0xf] %v371
                  %v373 = vld [vmem:[%s345 + $0x68] sm:$0xf]
                  %374 = vst [vmem:[%s346 + $0x34] sm:$0xf] %v373
                  %v375 = vld [vmem:[%s345 + $0x70] sm:$0xf]
                  %376 = vst [vmem:[%s346 + $0x38] sm:$0xf] %v375
                  %v377 = vld [vmem:[%s345 + $0x78] sm:$0xf]
                  %378 = vst [vmem:[%s346 + $0x3c] sm:$0xf] %v377
                $region67: #{tpu_custom_call.1} parent=54 // loop_footer
                  %s344 = sadd.s32 1, %s340
                $region68: #{tpu_custom_call.1} parent=54 // loop_footer_branch
                  %339 = sbr.rel target = $region64
                $region69: #{tpu_custom_call.1} parent=54 // loop_exit
                  _
              $region55: #{tpu_custom_call.1} parent=39 // pred_fallthru
                _
            $region40: #{tpu_custom_call.1} parent=35 // pred_fallthru
              _
            // Predicated region
            $region41: #{tpu_custom_call.1} parent=35 // pred_check
              _
            $region42: #{tpu_custom_call.1} parent=35 // pred_check_branch
              %286 = sbr.rel (0) target = $region44
            $region43: #{tpu_custom_call.1} parent=35 // pred_region
              loop: start=0, step=1, limit=1
              $region45: #{tpu_custom_call.1} parent=43 // loop_pre_header
                _
              $region46: #{tpu_custom_call.1} parent=43 // loop_header
                %s289 = sphi 0, %s293
                %p290 = scmp.ge.s32.totalorder %s289, 1
                %s294 = sphi %s280, %s280
                %s295 = sphi %s275, %s275
              $region47: #{tpu_custom_call.1} parent=43 // loop_header_branch
                %292 = sbr.rel (%p290) target = $region51
              $region48: #{tpu_custom_call.1} parent=43 // loop_body
                %v296 = vld [vmem:[%s294] sm:$0xf]
                %297 = vst [vmem:[%s295] sm:$0xf] %v296
                %v298 = vld [vmem:[%s294 + $0x8] sm:$0xf]
                %299 = vst [vmem:[%s295 + $0x4] sm:$0xf] %v298
                %v300 = vld [vmem:[%s294 + $0x10] sm:$0xf]
                %301 = vst [vmem:[%s295 + $0x8] sm:$0xf] %v300
                %v302 = vld [vmem:[%s294 + $0x18] sm:$0xf]
                %303 = vst [vmem:[%s295 + $0xc] sm:$0xf] %v302
                %v304 = vld [vmem:[%s294 + $0x20] sm:$0xf]
                %305 = vst [vmem:[%s295 + $0x10] sm:$0xf] %v304
                %v306 = vld [vmem:[%s294 + $0x28] sm:$0xf]
                %307 = vst [vmem:[%s295 + $0x14] sm:$0xf] %v306
                %v308 = vld [vmem:[%s294 + $0x30] sm:$0xf]
                %309 = vst [vmem:[%s295 + $0x18] sm:$0xf] %v308
                %v310 = vld [vmem:[%s294 + $0x38] sm:$0xf]
                %311 = vst [vmem:[%s295 + $0x1c] sm:$0xf] %v310
                %v312 = vld [vmem:[%s294 + $0x40] sm:$0xf]
                %313 = vst [vmem:[%s295 + $0x20] sm:$0xf] %v312
                %v314 = vld [vmem:[%s294 + $0x48] sm:$0xf]
                %315 = vst [vmem:[%s295 + $0x24] sm:$0xf] %v314
                %v316 = vld [vmem:[%s294 + $0x50] sm:$0xf]
                %317 = vst [vmem:[%s295 + $0x28] sm:$0xf] %v316
                %v318 = vld [vmem:[%s294 + $0x58] sm:$0xf]
                %319 = vst [vmem:[%s295 + $0x2c] sm:$0xf] %v318
                %v320 = vld [vmem:[%s294 + $0x60] sm:$0xf]
                %321 = vst [vmem:[%s295 + $0x30] sm:$0xf] %v320
                %v322 = vld [vmem:[%s294 + $0x68] sm:$0xf]
                %323 = vst [vmem:[%s295 + $0x34] sm:$0xf] %v322
                %v324 = vld [vmem:[%s294 + $0x70] sm:$0xf]
                %325 = vst [vmem:[%s295 + $0x38] sm:$0xf] %v324
                %v326 = vld [vmem:[%s294 + $0x78] sm:$0xf]
                %327 = vst [vmem:[%s295 + $0x3c] sm:$0xf] %v326
              $region49: #{tpu_custom_call.1} parent=43 // loop_footer
                %s293 = sadd.s32 1, %s289
              $region50: #{tpu_custom_call.1} parent=43 // loop_footer_branch
                %288 = sbr.rel target = $region46
              $region51: #{tpu_custom_call.1} parent=43 // loop_exit
                _
            $region44: #{tpu_custom_call.1} parent=35 // pred_fallthru
              _
          $region36: #{tpu_custom_call.1} parent=31 // pred_fallthru
            _
          %379 = vnop
        $region32: #{tpu_custom_call.1} parent=27 // pred_fallthru
          _
        // Predicated region
        $region70: #{tpu_custom_call.1} parent=27 // pred_check
          %p380 = pneg %p84
        $region71: #{tpu_custom_call.1} parent=27 // pred_check_branch
          %382 = sbr.rel (%p380) target = $region73
        $region72: #{tpu_custom_call.1} parent=27 // pred_region
          %s383 = sand.u32 %s74, 1
          %s384 = scalar_lea.sflag [#allocation5], %s383
          %s385 = sand.u32 %s74, 1
          %s386 = smul.addr %s385, 64
          %s387 = scalar_lea.vmem [#allocation4], %s386
          %s388 = smul.u32 16, %s32
          %s390 = ssub.s32 1024, 1024
          %391 = vsyncadd %s384, %s390
          %s392 = smul.addr %s388, 64
          %s393 = scalar_lea.hbm %s1, %s392
          %s394 = sshll.u32 %s387, 4
          %s395 = int_to_ptr.vmem [resolvable:$true] %s394
          %400 = dma.hbm_to_vmem [thread:$0]  %s393, 1024, %s395, %s384, 64, 64, 4
        $region73: #{tpu_custom_call.1} parent=27 // pred_fallthru
          _
        // Predicated region
        $region74: #{tpu_custom_call.1} parent=27 // pred_check
          %p401 = pneg %p110
        $region75: #{tpu_custom_call.1} parent=27 // pred_check_branch
          %403 = sbr.rel (%p401) target = $region77
        $region76: #{tpu_custom_call.1} parent=27 // pred_region
          %s404 = smul.u32 16, %s31
          %p405 = scmp.lt.s32.totalorder %s404, 31
          %s406 = scalar_select %p405, %s404, 31
          %s407 = smul.addr %s406, 8
          %s408 = scalar_lea.vmem %s2, %s407
          %s409 = smul.u32 16, %s31
        $region77: #{tpu_custom_call.1} parent=27 // pred_fallthru
          _
      $region28: #{tpu_custom_call.1} parent=5 // pred_fallthru
        _
      %p410 = scmp.le.s32.totalorder 1, %s24
      %p411 = scmp.lt.s32.totalorder %s24, 5
      %p412 = pnand %p410, %p411
      %p413 = pneg %p412
      // Predicated region
      $region78: #{tpu_custom_call.1} parent=5 // pred_check
        _
      $region79: #{tpu_custom_call.1} parent=5 // pred_check_branch
        %415 = sbr.rel (%p412) target = $region81
      $region80: #{tpu_custom_call.1} parent=5 // pred_region
        %s416 = ssub.s32 %s24, 1
        %s417 = sand.u32 %s51, 1
        %s418 = sand.u32 %s51, 1
        %s419 = smul.addr %s418, 64
        %s420 = scalar_lea.vmem [#allocation3], %s419
        // Predicated region
        $region82: #{tpu_custom_call.1} parent=80 // pred_check
          %p421 = pneg %p64
        $region83: #{tpu_custom_call.1} parent=80 // pred_check_branch
          %423 = sbr.rel (%p421) target = $region85
        $region84: #{tpu_custom_call.1} parent=80 // pred_region
          _
        $region85: #{tpu_custom_call.1} parent=80 // pred_fallthru
          _
        %s424 = sand.u32 %s77, 1
        %s425 = scalar_lea.sflag [#allocation5], %s424
        %s426 = sand.u32 %s77, 1
        %s427 = smul.addr %s426, 64
        %s428 = scalar_lea.vmem [#allocation4], %s427
        // Predicated region
        $region86: #{tpu_custom_call.1} parent=80 // pred_check
          %p429 = pneg %p90
        $region87: #{tpu_custom_call.1} parent=80 // pred_check_branch
          %431 = sbr.rel (%p429) target = $region89
        $region88: #{tpu_custom_call.1} parent=80 // pred_region
          %432 = dma.done %s425, 1024
        $region89: #{tpu_custom_call.1} parent=80 // pred_fallthru
          _
        // Predicated region
        $region90: #{tpu_custom_call.1} parent=80 // pred_check
          %p433 = pneg %p158
        $region91: #{tpu_custom_call.1} parent=80 // pred_check_branch
          %435 = sbr.rel (%p433) target = $region93
        $region92: #{tpu_custom_call.1} parent=80 // pred_region
          %436 = dma.done [#allocation8], 2048
        $region93: #{tpu_custom_call.1} parent=80 // pred_fallthru
          _
        %s437 = sand.u32 %s51, 1
        %s438 = sand.u32 %s51, 1
        %s439 = smul.addr %s438, 64
        %s440 = scalar_lea.vmem [#allocation3], %s439
        %p441 = pneg %p64
        %p442 = pneg %p61
        %s443 = sand.u32 %s77, 1
        %s444 = scalar_lea.sflag [#allocation5], %s443
        %s445 = sand.u32 %s77, 1
        %s446 = smul.addr %s445, 64
        %s447 = scalar_lea.vmem [#allocation4], %s446
        %p448 = pneg %p90
        %p449 = pneg %p87
        %s450 = smul.u32 16, %s33
        %p451 = scmp.lt.s32.totalorder %s450, 31
        %s452 = scalar_select %p451, %s450, 31
        %s453 = smul.addr %s452, 8
        %s454 = scalar_lea.vmem %s2, %s453
        %p455 = pneg %p116
        %p456 = pneg %p113
        %p457 = pneg %p137
        %p458 = pneg %p134
        %p459 = pneg %p158
        %p460 = pneg %p155
        %p461 = pneg %p179
        %p462 = pneg %p176
        %p463 = pneg %p205
        %p464 = pneg %p202
        %s465 = sand.u32 %s192, 1
        %s466 = scalar_lea.sflag [#allocation6], %s465
        %s467 = sand.u32 %s192, 1
        %s468 = smul.addr %s467, 128
        %s469 = scalar_lea.vmem [#allocation9], %s468
        %p470 = pneg %p231
        %p471 = pneg %p228
        %s472 = sand.u32 %s218, 1
        %s473 = scalar_lea.sflag [#allocation11], %s472
        %s474 = sand.u32 %s218, 1
        %s475 = smul.addr %s474, 128
        %s476 = scalar_lea.vmem [#allocation10], %s475
        %s477 = smul.u32 16, %s33
        %s478 = smul.u32 16, %s34
        %s479 = smul.u32 16, %s33
        %p480 = scmp.lt.s32.totalorder %s479, 31
        %s481 = scalar_select %p480, %s479, 31
        %s482 = smul.addr %s481, 8
        %s483 = scalar_lea.vmem %s2, %s482
        %s484 = smul.u32 16, %s33
        %s485 = smul.u32 16, %s33
        %s486 = smul.u32 16, %s33
        %p488 = scmp.eq.s32.totalorder %s34, 0
        // Predicated region
        $region94: #{tpu_custom_call.1} parent=80 // pred_check
          %p489 = pneg %p488
        $region95: #{tpu_custom_call.1} parent=80 // pred_check_branch
          %491 = sbr.rel (%p489) target = $region97
        $region96: #{tpu_custom_call.1} parent=80 // pred_region
          %492 = vst [vmem:[#allocation2] sm:$0xff] 0.0
          %493 = vst [vmem:[#allocation2 + $0x8] sm:$0xff] 0.0
          %494 = vst [vmem:[#allocation2 + $0x10] sm:$0xff] 0.0
          %495 = vst [vmem:[#allocation2 + $0x18] sm:$0xff] 0.0
          %496 = vst [vmem:[#allocation2 + $0x20] sm:$0xff] 0.0
          %497 = vst [vmem:[#allocation2 + $0x28] sm:$0xff] 0.0
          %498 = vst [vmem:[#allocation2 + $0x30] sm:$0xff] 0.0
          %499 = vst [vmem:[#allocation2 + $0x38] sm:$0xff] 0.0
          %500 = vst [vmem:[#allocation2 + $0x40] sm:$0xff] 0.0
          %501 = vst [vmem:[#allocation2 + $0x48] sm:$0xff] 0.0
          %502 = vst [vmem:[#allocation2 + $0x50] sm:$0xff] 0.0
          %503 = vst [vmem:[#allocation2 + $0x58] sm:$0xff] 0.0
          %504 = vst [vmem:[#allocation2 + $0x60] sm:$0xff] 0.0
          %505 = vst [vmem:[#allocation2 + $0x68] sm:$0xff] 0.0
          %506 = vst [vmem:[#allocation2 + $0x70] sm:$0xff] 0.0
          %507 = vst [vmem:[#allocation2 + $0x78] sm:$0xff] 0.0
        $region97: #{tpu_custom_call.1} parent=80 // pred_fallthru
          _
        %v508 = vld [vmem:[#allocation2] sm:$0xff]
        %v509 = vld [vmem:[#allocation2 + $0x8] sm:$0xff]
        %v510 = vld [vmem:[#allocation2 + $0x10] sm:$0xff]
        %v511 = vld [vmem:[#allocation2 + $0x18] sm:$0xff]
        %v512 = vld [vmem:[#allocation2 + $0x20] sm:$0xff]
        %v513 = vld [vmem:[#allocation2 + $0x28] sm:$0xff]
        %v514 = vld [vmem:[#allocation2 + $0x30] sm:$0xff]
        %v515 = vld [vmem:[#allocation2 + $0x38] sm:$0xff]
        %v516 = vld [vmem:[#allocation2 + $0x40] sm:$0xff]
        %v517 = vld [vmem:[#allocation2 + $0x48] sm:$0xff]
        %v518 = vld [vmem:[#allocation2 + $0x50] sm:$0xff]
        %v519 = vld [vmem:[#allocation2 + $0x58] sm:$0xff]
        %v520 = vld [vmem:[#allocation2 + $0x60] sm:$0xff]
        %v521 = vld [vmem:[#allocation2 + $0x68] sm:$0xff]
        %v522 = vld [vmem:[#allocation2 + $0x70] sm:$0xff]
        %v523 = vld [vmem:[#allocation2 + $0x78] sm:$0xff]
        %v524 = vld [vmem:[%s420] sm:$0xf]
        %v525 = vld [vmem:[%s420 + $0x4] sm:$0xf]
        %v526 = vld [vmem:[%s420 + $0x8] sm:$0xf]
        %v527 = vld [vmem:[%s420 + $0xc] sm:$0xf]
        %v528 = vld [vmem:[%s420 + $0x10] sm:$0xf]
        %v529 = vld [vmem:[%s420 + $0x14] sm:$0xf]
        %v530 = vld [vmem:[%s420 + $0x18] sm:$0xf]
        %v531 = vld [vmem:[%s420 + $0x1c] sm:$0xf]
        %v532 = vld [vmem:[%s420 + $0x20] sm:$0xf]
        %v533 = vld [vmem:[%s420 + $0x24] sm:$0xf]
        %v534 = vld [vmem:[%s420 + $0x28] sm:$0xf]
        %v535 = vld [vmem:[%s420 + $0x2c] sm:$0xf]
        %v536 = vld [vmem:[%s420 + $0x30] sm:$0xf]
        %v537 = vld [vmem:[%s420 + $0x34] sm:$0xf]
        %v538 = vld [vmem:[%s420 + $0x38] sm:$0xf]
        %v539 = vld [vmem:[%s420 + $0x3c] sm:$0xf]
        %v540 = vld [vmem:[%s428] sm:$0xf]
        %v541 = vld [vmem:[%s428 + $0x4] sm:$0xf]
        %v542 = vld [vmem:[%s428 + $0x8] sm:$0xf]
        %v543 = vld [vmem:[%s428 + $0xc] sm:$0xf]
        %v544 = vld [vmem:[%s428 + $0x10] sm:$0xf]
        %v545 = vld [vmem:[%s428 + $0x14] sm:$0xf]
        %v546 = vld [vmem:[%s428 + $0x18] sm:$0xf]
        %v547 = vld [vmem:[%s428 + $0x1c] sm:$0xf]
        %v548 = vld [vmem:[%s428 + $0x20] sm:$0xf]
        %v549 = vld [vmem:[%s428 + $0x24] sm:$0xf]
        %v550 = vld [vmem:[%s428 + $0x28] sm:$0xf]
        %v551 = vld [vmem:[%s428 + $0x2c] sm:$0xf]
        %v552 = vld [vmem:[%s428 + $0x30] sm:$0xf]
        %v553 = vld [vmem:[%s428 + $0x34] sm:$0xf]
        %v554 = vld [vmem:[%s428 + $0x38] sm:$0xf]
        %v555 = vld [vmem:[%s428 + $0x3c] sm:$0xf]
        %v572 = vunpack.c.l.b16 %v524
        %v573 = vunpack.c.l.b16 %v525
        %v574 = vunpack.c.l.b16 %v526
        %v575 = vunpack.c.l.b16 %v527
        %v576 = vunpack.c.l.b16 %v528
        %v577 = vunpack.c.l.b16 %v529
        %v578 = vunpack.c.l.b16 %v530
        %v579 = vunpack.c.l.b16 %v531
        %v580 = vunpack.c.l.b16 %v532
        %v581 = vunpack.c.l.b16 %v533
        %v582 = vunpack.c.l.b16 %v534
        %v583 = vunpack.c.l.b16 %v535
        %v584 = vunpack.c.l.b16 %v536
        %v585 = vunpack.c.l.b16 %v537
        %v586 = vunpack.c.l.b16 %v538
        %v587 = vunpack.c.l.b16 %v539
        %v588 = vpack.c.b16 %v573, %v572
        %v589 = vpack.c.b16 %v575, %v574
        %v590 = vpack.c.b16 %v577, %v576
        %v591 = vpack.c.b16 %v579, %v578
        %v592 = vpack.c.b16 %v581, %v580
        %v593 = vpack.c.b16 %v583, %v582
        %v594 = vpack.c.b16 %v585, %v584
        %v595 = vpack.c.b16 %v587, %v586
        %v620 = vunpack.c.l.b16 %v540
        %v621 = vunpack.c.l.b16 %v541
        %v622 = vunpack.c.l.b16 %v542
        %v623 = vunpack.c.l.b16 %v543
        %v624 = vunpack.c.l.b16 %v544
        %v625 = vunpack.c.l.b16 %v545
        %v626 = vunpack.c.l.b16 %v546
        %v627 = vunpack.c.l.b16 %v547
        %v628 = vunpack.c.l.b16 %v548
        %v629 = vunpack.c.l.b16 %v549
        %v630 = vunpack.c.l.b16 %v550
        %v631 = vunpack.c.l.b16 %v551
        %v632 = vunpack.c.l.b16 %v552
        %v633 = vunpack.c.l.b16 %v553
        %v634 = vunpack.c.l.b16 %v554
        %v635 = vunpack.c.l.b16 %v555
        %v636 = vpack.c.b16 %v621, %v620
        %v637 = vpack.c.b16 %v623, %v622
        %v638 = vpack.c.b16 %v625, %v624
        %v639 = vpack.c.b16 %v627, %v626
        %v640 = vpack.c.b16 %v629, %v628
        %v641 = vpack.c.b16 %v631, %v630
        %v642 = vpack.c.b16 %v633, %v632
        %v643 = vpack.c.b16 %v635, %v634
        %652 = vmatprep.subr.bf16.mxu0 0
        %653 = vmatpush1.bf16.msra.mxu0 %v636
        %654 = vmatprep.subr.bf16.mxu0 0
        %655 = vmatpush1.bf16.msra.mxu0 %v637
        %656 = vmatprep.subr.bf16.mxu0 0
        %657 = vmatpush1.bf16.msra.mxu0 %v638
        %658 = vmatprep.subr.bf16.mxu0 0
        %659 = vmatpush1.bf16.msra.mxu0 %v639
        %660 = vmatprep.subr.bf16.mxu0 0
        %661 = vmatpush1.bf16.msra.mxu0 %v640
        %662 = vmatprep.subr.bf16.mxu0 0
        %663 = vmatpush1.bf16.msra.mxu0 %v641
        %664 = vmatprep.subr.bf16.mxu0 0
        %665 = vmatpush1.bf16.msra.mxu0 %v642
        %666 = vmatprep.subr.bf16.mxu0 0
        %667 = vmatpush1.bf16.msra.mxu0 %v643
        %668 = vmatprep.subr.bf16.mxu0 0
        %669 = vmatpush1.bf16.msra.mxu0 0
        %670 = vmatprep.subr.bf16.mxu0 0
        %671 = vmatpush1.bf16.msra.mxu0 0
        %672 = vmatprep.subr.bf16.mxu0 0
        %673 = vmatpush1.bf16.msra.mxu0 0
        %674 = vmatprep.subr.bf16.mxu0 0
        %675 = vmatpush1.bf16.msra.mxu0 0
        %676 = vmatprep.subr.bf16.mxu0 0
        %677 = vmatpush1.bf16.msra.mxu0 0
        %678 = vmatprep.subr.bf16.mxu0 0
        %679 = vmatpush1.bf16.msra.mxu0 0
        %680 = vmatprep.subr.bf16.mxu0 0
        %681 = vmatpush1.bf16.msra.mxu0 0
        %682 = vmatprep.subr.bf16.mxu0 0
        %683 = vmatpush1.bf16.msra.mxu0 0
        %684 = vmatprep.mubr.bf16.mxu0 0
        %685 = vmatmul.mubr.bf16.gmra.mrb[0].mxu0 %v588
        %v686 = vpop.f32.mrb[0].mxu0
        %v687 = vadd.f32 0.0, %v686
        %v688 = vpop.f32.mrb[0].mxu0
        %v689 = vpop.f32.mrb[0].mxu0
        %v690 = vadd.f32 0.0, %v689
        %v691 = vpop.f32.mrb[0].mxu0
        %692 = vmatprep.mubr.bf16.mxu0 0
        %693 = vmatmul.mubr.bf16.gmra.mrb[0].mxu0 %v589
        %v694 = vpop.f32.mrb[0].mxu0
        %v695 = vadd.f32 0.0, %v694
        %v696 = vpop.f32.mrb[0].mxu0
        %v697 = vpop.f32.mrb[0].mxu0
        %v698 = vadd.f32 0.0, %v697
        %v699 = vpop.f32.mrb[0].mxu0
        %700 = vmatprep.mubr.bf16.mxu0 0
        %701 = vmatmul.mubr.bf16.gmra.mrb[0].mxu0 %v590
        %v702 = vpop.f32.mrb[0].mxu0
        %v703 = vadd.f32 0.0, %v702
        %v704 = vpop.f32.mrb[0].mxu0
        %v705 = vpop.f32.mrb[0].mxu0
        %v706 = vadd.f32 0.0, %v705
        %v707 = vpop.f32.mrb[0].mxu0
        %708 = vmatprep.mubr.bf16.mxu0 0
        %709 = vmatmul.mubr.bf16.gmra.mrb[0].mxu0 %v591
        %v710 = vpop.f32.mrb[0].mxu0
        %v711 = vadd.f32 0.0, %v710
        %v712 = vpop.f32.mrb[0].mxu0
        %v713 = vpop.f32.mrb[0].mxu0
        %v714 = vadd.f32 0.0, %v713
        %v715 = vpop.f32.mrb[0].mxu0
        %716 = vmatprep.mubr.bf16.mxu0 0
        %717 = vmatmul.mubr.bf16.gmra.mrb[0].mxu0 %v592
        %v718 = vpop.f32.mrb[0].mxu0
        %v719 = vadd.f32 0.0, %v718
        %v720 = vpop.f32.mrb[0].mxu0
        %v721 = vpop.f32.mrb[0].mxu0
        %v722 = vadd.f32 0.0, %v721
        %v723 = vpop.f32.mrb[0].mxu0
        %724 = vmatprep.mubr.bf16.mxu0 0
        %725 = vmatmul.mubr.bf16.gmra.mrb[0].mxu0 %v593
        %v726 = vpop.f32.mrb[0].mxu0
        %v727 = vadd.f32 0.0, %v726
        %v728 = vpop.f32.mrb[0].mxu0
        %v729 = vpop.f32.mrb[0].mxu0
        %v730 = vadd.f32 0.0, %v729
        %v731 = vpop.f32.mrb[0].mxu0
        %732 = vmatprep.mubr.bf16.mxu0 0
        %733 = vmatmul.mubr.bf16.gmra.mrb[0].mxu0 %v594
        %v734 = vpop.f32.mrb[0].mxu0
        %v735 = vadd.f32 0.0, %v734
        %v736 = vpop.f32.mrb[0].mxu0
        %v737 = vpop.f32.mrb[0].mxu0
        %v738 = vadd.f32 0.0, %v737
        %v739 = vpop.f32.mrb[0].mxu0
        %740 = vmatprep.mubr.bf16.mxu0 0
        %741 = vmatmul.mubr.bf16.gmra.mrb[0].mxu0 %v595
        %v742 = vpop.f32.mrb[0].mxu0
        %v743 = vadd.f32 0.0, %v742
        %v744 = vpop.f32.mrb[0].mxu0
        %v745 = vpop.f32.mrb[0].mxu0
        %v746 = vadd.f32 0.0, %v745
        %v747 = vpop.f32.mrb[0].mxu0
        %748 = vdwg.mxu0
        %v749 = vadd.f32 %v508, %v687
        %v750 = vadd.f32 %v509, %v690
        %v751 = vadd.f32 %v510, %v695
        %v752 = vadd.f32 %v511, %v698
        %v753 = vadd.f32 %v512, %v703
        %v754 = vadd.f32 %v513, %v706
        %v755 = vadd.f32 %v514, %v711
        %v756 = vadd.f32 %v515, %v714
        %v757 = vadd.f32 %v516, %v719
        %v758 = vadd.f32 %v517, %v722
        %v759 = vadd.f32 %v518, %v727
        %v760 = vadd.f32 %v519, %v730
        %v761 = vadd.f32 %v520, %v735
        %v762 = vadd.f32 %v521, %v738
        %v763 = vadd.f32 %v522, %v743
        %v764 = vadd.f32 %v523, %v746
        %765 = vst [vmem:[#allocation2] sm:$0xff] %v749
        %766 = vst [vmem:[#allocation2 + $0x8] sm:$0xff] %v750
        %767 = vst [vmem:[#allocation2 + $0x10] sm:$0xff] %v751
        %768 = vst [vmem:[#allocation2 + $0x18] sm:$0xff] %v752
        %769 = vst [vmem:[#allocation2 + $0x20] sm:$0xff] %v753
        %770 = vst [vmem:[#allocation2 + $0x28] sm:$0xff] %v754
        %771 = vst [vmem:[#allocation2 + $0x30] sm:$0xff] %v755
        %772 = vst [vmem:[#allocation2 + $0x38] sm:$0xff] %v756
        %773 = vst [vmem:[#allocation2 + $0x40] sm:$0xff] %v757
        %774 = vst [vmem:[#allocation2 + $0x48] sm:$0xff] %v758
        %775 = vst [vmem:[#allocation2 + $0x50] sm:$0xff] %v759
        %776 = vst [vmem:[#allocation2 + $0x58] sm:$0xff] %v760
        %777 = vst [vmem:[#allocation2 + $0x60] sm:$0xff] %v761
        %778 = vst [vmem:[#allocation2 + $0x68] sm:$0xff] %v762
        %779 = vst [vmem:[#allocation2 + $0x70] sm:$0xff] %v763
        %780 = vst [vmem:[#allocation2 + $0x78] sm:$0xff] %v764
        %p781 = scmp.eq.s32.totalorder %s34, 1
        // Predicated region
        $region98: #{tpu_custom_call.1} parent=80 // pred_check
          %p782 = pneg %p781
        $region99: #{tpu_custom_call.1} parent=80 // pred_check_branch
          %784 = sbr.rel (%p782) target = $region101
        $region100: #{tpu_custom_call.1} parent=80 // pred_region
          %v785 = vld [vmem:[#allocation2] sm:$0xff]
          %v786 = vld [vmem:[#allocation2 + $0x8] sm:$0xff]
          %v787 = vld [vmem:[#allocation2 + $0x10] sm:$0xff]
          %v788 = vld [vmem:[#allocation2 + $0x18] sm:$0xff]
          %v789 = vld [vmem:[#allocation2 + $0x20] sm:$0xff]
          %v790 = vld [vmem:[#allocation2 + $0x28] sm:$0xff]
          %v791 = vld [vmem:[#allocation2 + $0x30] sm:$0xff]
          %v792 = vld [vmem:[#allocation2 + $0x38] sm:$0xff]
          %v793 = vld [vmem:[#allocation2 + $0x40] sm:$0xff]
          %v794 = vld [vmem:[#allocation2 + $0x48] sm:$0xff]
          %v795 = vld [vmem:[#allocation2 + $0x50] sm:$0xff]
          %v796 = vld [vmem:[#allocation2 + $0x58] sm:$0xff]
          %v797 = vld [vmem:[#allocation2 + $0x60] sm:$0xff]
          %v798 = vld [vmem:[#allocation2 + $0x68] sm:$0xff]
          %v799 = vld [vmem:[#allocation2 + $0x70] sm:$0xff]
          %v800 = vld [vmem:[#allocation2 + $0x78] sm:$0xff]
          %v801 = vld [vmem:[%s483] sm:$0xff]
          %v802 = vld [vmem:[%s483 + $0x8] sm:$0xff]
          %v803 = vld [vmem:[%s483 + $0x10] sm:$0xff]
          %v804 = vld [vmem:[%s483 + $0x18] sm:$0xff]
          %v805 = vld [vmem:[%s483 + $0x20] sm:$0xff]
          %v806 = vld [vmem:[%s483 + $0x28] sm:$0xff]
          %v807 = vld [vmem:[%s483 + $0x30] sm:$0xff]
          %v808 = vld [vmem:[%s483 + $0x38] sm:$0xff]
          %v809 = vld [vmem:[%s483 + $0x40] sm:$0xff]
          %v810 = vld [vmem:[%s483 + $0x48] sm:$0xff]
          %v811 = vld [vmem:[%s483 + $0x50] sm:$0xff]
          %v812 = vld [vmem:[%s483 + $0x58] sm:$0xff]
          %v813 = vld [vmem:[%s483 + $0x60] sm:$0xff]
          %v814 = vld [vmem:[%s483 + $0x68] sm:$0xff]
          %v815 = vld [vmem:[%s483 + $0x70] sm:$0xff]
          %v816 = vld [vmem:[%s483 + $0x78] sm:$0xff]
          %818 = vset.pattern.permute.xlu0 0
          %819 = vperm.xlu0 %818, %v801
          %v820 = vpop.permute.xlu0 %819
          %823 = vset.pattern.permute.xlu0 0
          %824 = vperm.xlu0 %823, %v802
          %v825 = vpop.permute.xlu0 %824
          %828 = vset.pattern.permute.xlu0 0
          %829 = vperm.xlu0 %828, %v803
          %v830 = vpop.permute.xlu0 %829
          %833 = vset.pattern.permute.xlu0 0
          %834 = vperm.xlu0 %833, %v804
          %v835 = vpop.permute.xlu0 %834
          %838 = vset.pattern.permute.xlu0 0
          %839 = vperm.xlu0 %838, %v805
          %v840 = vpop.permute.xlu0 %839
          %843 = vset.pattern.permute.xlu0 0
          %844 = vperm.xlu0 %843, %v806
          %v845 = vpop.permute.xlu0 %844
          %848 = vset.pattern.permute.xlu0 0
          %849 = vperm.xlu0 %848, %v807
          %v850 = vpop.permute.xlu0 %849
          %853 = vset.pattern.permute.xlu0 0
          %854 = vperm.xlu0 %853, %v808
          %v855 = vpop.permute.xlu0 %854
          %858 = vset.pattern.permute.xlu0 0
          %859 = vperm.xlu0 %858, %v809
          %v860 = vpop.permute.xlu0 %859
          %863 = vset.pattern.permute.xlu0 0
          %864 = vperm.xlu0 %863, %v810
          %v865 = vpop.permute.xlu0 %864
          %868 = vset.pattern.permute.xlu0 0
          %869 = vperm.xlu0 %868, %v811
          %v870 = vpop.permute.xlu0 %869
          %873 = vset.pattern.permute.xlu0 0
          %874 = vperm.xlu0 %873, %v812
          %v875 = vpop.permute.xlu0 %874
          %878 = vset.pattern.permute.xlu0 0
          %879 = vperm.xlu0 %878, %v813
          %v880 = vpop.permute.xlu0 %879
          %883 = vset.pattern.permute.xlu0 0
          %884 = vperm.xlu0 %883, %v814
          %v885 = vpop.permute.xlu0 %884
          %888 = vset.pattern.permute.xlu0 0
          %889 = vperm.xlu0 %888, %v815
          %v890 = vpop.permute.xlu0 %889
          %893 = vset.pattern.permute.xlu0 0
          %894 = vperm.xlu0 %893, %v816
          %v895 = vpop.permute.xlu0 %894
          %v897 = vmul.f32 %v785, %v820
          %v898 = vmul.f32 %v786, %v825
          %v899 = vmul.f32 %v787, %v830
          %v900 = vmul.f32 %v788, %v835
          %v901 = vmul.f32 %v789, %v840
          %v902 = vmul.f32 %v790, %v845
          %v903 = vmul.f32 %v791, %v850
          %v904 = vmul.f32 %v792, %v855
          %v905 = vmul.f32 %v793, %v860
          %v906 = vmul.f32 %v794, %v865
          %v907 = vmul.f32 %v795, %v870
          %v908 = vmul.f32 %v796, %v875
          %v909 = vmul.f32 %v797, %v880
          %v910 = vmul.f32 %v798, %v885
          %v911 = vmul.f32 %v799, %v890
          %v912 = vmul.f32 %v800, %v895
          %v913 = vld [vmem:[%s3] sm:$0x1]
          %v915 = vlaneseq
          %v916 = vshrl.u32 %v915, 7
          %v917 = vsub.s32 0, %v916
          %v918 = vrot.slane %v913, %v917
          %v920 = vadd.f32 %v897, %v918
          %v921 = vadd.f32 %v898, %v918
          %v922 = vadd.f32 %v899, %v918
          %v923 = vadd.f32 %v900, %v918
          %v924 = vadd.f32 %v901, %v918
          %v925 = vadd.f32 %v902, %v918
          %v926 = vadd.f32 %v903, %v918
          %v927 = vadd.f32 %v904, %v918
          %v928 = vadd.f32 %v905, %v918
          %v929 = vadd.f32 %v906, %v918
          %v930 = vadd.f32 %v907, %v918
          %v931 = vadd.f32 %v908, %v918
          %v932 = vadd.f32 %v909, %v918
          %v933 = vadd.f32 %v910, %v918
          %v934 = vadd.f32 %v911, %v918
          %v935 = vadd.f32 %v912, %v918
          %v936 = vmax.f32 %v920, 0.0
          %v937 = vmax.f32 %v921, 0.0
          %v938 = vmax.f32 %v922, 0.0
          %v939 = vmax.f32 %v923, 0.0
          %v940 = vmax.f32 %v924, 0.0
          %v941 = vmax.f32 %v925, 0.0
          %v942 = vmax.f32 %v926, 0.0
          %v943 = vmax.f32 %v927, 0.0
          %v944 = vmax.f32 %v928, 0.0
          %v945 = vmax.f32 %v929, 0.0
          %v946 = vmax.f32 %v930, 0.0
          %v947 = vmax.f32 %v931, 0.0
          %v948 = vmax.f32 %v932, 0.0
          %v949 = vmax.f32 %v933, 0.0
          %v950 = vmax.f32 %v934, 0.0
          %v951 = vmax.f32 %v935, 0.0
          %952 = vst [vmem:[%s469] sm:$0xff] %v936
          %953 = vst [vmem:[%s469 + $0x8] sm:$0xff] %v937
          %954 = vst [vmem:[%s469 + $0x10] sm:$0xff] %v938
          %955 = vst [vmem:[%s469 + $0x18] sm:$0xff] %v939
          %956 = vst [vmem:[%s469 + $0x20] sm:$0xff] %v940
          %957 = vst [vmem:[%s469 + $0x28] sm:$0xff] %v941
          %958 = vst [vmem:[%s469 + $0x30] sm:$0xff] %v942
          %959 = vst [vmem:[%s469 + $0x38] sm:$0xff] %v943
          %960 = vst [vmem:[%s469 + $0x40] sm:$0xff] %v944
          %961 = vst [vmem:[%s469 + $0x48] sm:$0xff] %v945
          %962 = vst [vmem:[%s469 + $0x50] sm:$0xff] %v946
          %963 = vst [vmem:[%s469 + $0x58] sm:$0xff] %v947
          %964 = vst [vmem:[%s469 + $0x60] sm:$0xff] %v948
          %965 = vst [vmem:[%s469 + $0x68] sm:$0xff] %v949
          %966 = vst [vmem:[%s469 + $0x70] sm:$0xff] %v950
          %967 = vst [vmem:[%s469 + $0x78] sm:$0xff] %v951
          %v968 = vld [vmem:[#allocation7] sm:$0xff]
          %v969 = vld [vmem:[#allocation7 + $0x8] sm:$0xff]
          %v970 = vld [vmem:[#allocation7 + $0x10] sm:$0xff]
          %v971 = vld [vmem:[#allocation7 + $0x18] sm:$0xff]
          %v972 = vld [vmem:[#allocation7 + $0x20] sm:$0xff]
          %v973 = vld [vmem:[#allocation7 + $0x28] sm:$0xff]
          %v974 = vld [vmem:[#allocation7 + $0x30] sm:$0xff]
          %v975 = vld [vmem:[#allocation7 + $0x38] sm:$0xff]
          %v976 = vld [vmem:[#allocation7 + $0x40] sm:$0xff]
          %v977 = vld [vmem:[#allocation7 + $0x48] sm:$0xff]
          %v978 = vld [vmem:[#allocation7 + $0x50] sm:$0xff]
          %v979 = vld [vmem:[#allocation7 + $0x58] sm:$0xff]
          %v980 = vld [vmem:[#allocation7 + $0x60] sm:$0xff]
          %v981 = vld [vmem:[#allocation7 + $0x68] sm:$0xff]
          %v982 = vld [vmem:[#allocation7 + $0x70] sm:$0xff]
          %v983 = vld [vmem:[#allocation7 + $0x78] sm:$0xff]
          %v984 = vld [vmem:[%s5] sm:$0x1]
          %v986 = vlaneseq
          %v987 = vshrl.u32 %v986, 7
          %v988 = vsub.s32 0, %v987
          %v989 = vrot.slane %v984, %v988
          %991 = vmatprep.subr.mxu0 0.0
          %992 = vmatpush1.msra.mxu0 %v968
          %993 = vmatprep.subr.mxu0 0.0
          %994 = vmatpush1.msra.mxu0 %v969
          %995 = vmatprep.subr.mxu0 0.0
          %996 = vmatpush1.msra.mxu0 %v970
          %997 = vmatprep.subr.mxu0 0.0
          %998 = vmatpush1.msra.mxu0 %v971
          %999 = vmatprep.subr.mxu0 0.0
          %1000 = vmatpush1.msra.mxu0 %v972
          %1001 = vmatprep.subr.mxu0 0.0
          %1002 = vmatpush1.msra.mxu0 %v973
          %1003 = vmatprep.subr.mxu0 0.0
          %1004 = vmatpush1.msra.mxu0 %v974
          %1005 = vmatprep.subr.mxu0 0.0
          %1006 = vmatpush1.msra.mxu0 %v975
          %1007 = vmatprep.subr.mxu0 0.0
          %1008 = vmatpush1.msra.mxu0 %v976
          %1009 = vmatprep.subr.mxu0 0.0
          %1010 = vmatpush1.msra.mxu0 %v977
          %1011 = vmatprep.subr.mxu0 0.0
          %1012 = vmatpush1.msra.mxu0 %v978
          %1013 = vmatprep.subr.mxu0 0.0
          %1014 = vmatpush1.msra.mxu0 %v979
          %1015 = vmatprep.subr.mxu0 0.0
          %1016 = vmatpush1.msra.mxu0 %v980
          %1017 = vmatprep.subr.mxu0 0.0
          %1018 = vmatpush1.msra.mxu0 %v981
          %1019 = vmatprep.subr.mxu0 0.0
          %1020 = vmatpush1.msra.mxu0 %v982
          %1021 = vmatprep.subr.mxu0 0.0
          %1022 = vmatpush1.msra.mxu0 %v983
          %1023 = vmatprep.subr.mxu0 0.0
          %1024 = vmatpush1.msra.mxu0 0.0
          %1025 = vmatprep.subr.mxu0 0.0
          %1026 = vmatpush1.msra.mxu0 0.0
          %1027 = vmatprep.subr.mxu0 0.0
          %1028 = vmatpush1.msra.mxu0 0.0
          %1029 = vmatprep.subr.mxu0 0.0
          %1030 = vmatpush1.msra.mxu0 0.0
          %1031 = vmatprep.subr.mxu0 0.0
          %1032 = vmatpush1.msra.mxu0 0.0
          %1033 = vmatprep.subr.mxu0 0.0
          %1034 = vmatpush1.msra.mxu0 0.0
          %1035 = vmatprep.subr.mxu0 0.0
          %1036 = vmatpush1.msra.mxu0 0.0
          %1037 = vmatprep.subr.mxu0 0.0
          %1038 = vmatpush1.msra.mxu0 0.0
          %1039 = vmatprep.subr.mxu0 0.0
          %1040 = vmatpush1.msra.mxu0 0.0
          %1041 = vmatprep.subr.mxu0 0.0
          %1042 = vmatpush1.msra.mxu0 0.0
          %1043 = vmatprep.subr.mxu0 0.0
          %1044 = vmatpush1.msra.mxu0 0.0
          %1045 = vmatprep.subr.mxu0 0.0
          %1046 = vmatpush1.msra.mxu0 0.0
          %1047 = vmatprep.subr.mxu0 0.0
          %1048 = vmatpush1.msra.mxu0 0.0
          %1049 = vmatprep.subr.mxu0 0.0
          %1050 = vmatpush1.msra.mxu0 0.0
          %1051 = vmatprep.subr.mxu0 0.0
          %1052 = vmatpush1.msra.mxu0 0.0
          %1053 = vmatprep.subr.mxu0 0.0
          %1054 = vmatpush1.msra.mxu0 0.0
          %1055 = vmatprep.mubr.f32.mxu0 0.0
          %1056 = vmatmul.mubr.f32.gmra.mrb[0].mxu0 %v936
          %v1057 = vpop.f32.mrb[0].mxu0
          %v1058 = vadd.f32 %v989, %v1057
          %v1059 = vpop.f32.mrb[0].mxu0
          %1060 = vmatprep.mubr.f32.mxu0 0.0
          %1061 = vmatmul.mubr.f32.gmra.mrb[0].mxu0 %v937
          %v1062 = vpop.f32.mrb[0].mxu0
          %v1063 = vadd.f32 %v989, %v1062
          %v1064 = vpop.f32.mrb[0].mxu0
          %1065 = vmatprep.mubr.f32.mxu0 0.0
          %1066 = vmatmul.mubr.f32.gmra.mrb[0].mxu0 %v938
          %v1067 = vpop.f32.mrb[0].mxu0
          %v1068 = vadd.f32 %v989, %v1067
          %v1069 = vpop.f32.mrb[0].mxu0
          %1070 = vmatprep.mubr.f32.mxu0 0.0
          %1071 = vmatmul.mubr.f32.gmra.mrb[0].mxu0 %v939
          %v1072 = vpop.f32.mrb[0].mxu0
          %v1073 = vadd.f32 %v989, %v1072
          %v1074 = vpop.f32.mrb[0].mxu0
          %1075 = vmatprep.mubr.f32.mxu0 0.0
          %1076 = vmatmul.mubr.f32.gmra.mrb[0].mxu0 %v940
          %v1077 = vpop.f32.mrb[0].mxu0
          %v1078 = vadd.f32 %v989, %v1077
          %v1079 = vpop.f32.mrb[0].mxu0
          %1080 = vmatprep.mubr.f32.mxu0 0.0
          %1081 = vmatmul.mubr.f32.gmra.mrb[0].mxu0 %v941
          %v1082 = vpop.f32.mrb[0].mxu0
          %v1083 = vadd.f32 %v989, %v1082
          %v1084 = vpop.f32.mrb[0].mxu0
          %1085 = vmatprep.mubr.f32.mxu0 0.0
          %1086 = vmatmul.mubr.f32.gmra.mrb[0].mxu0 %v942
          %v1087 = vpop.f32.mrb[0].mxu0
          %v1088 = vadd.f32 %v989, %v1087
          %v1089 = vpop.f32.mrb[0].mxu0
          %1090 = vmatprep.mubr.f32.mxu0 0.0
          %1091 = vmatmul.mubr.f32.gmra.mrb[0].mxu0 %v943
          %v1092 = vpop.f32.mrb[0].mxu0
          %v1093 = vadd.f32 %v989, %v1092
          %v1094 = vpop.f32.mrb[0].mxu0
          %1095 = vmatprep.mubr.f32.mxu0 0.0
          %1096 = vmatmul.mubr.f32.gmra.mrb[0].mxu0 %v944
          %v1097 = vpop.f32.mrb[0].mxu0
          %v1098 = vadd.f32 %v989, %v1097
          %v1099 = vpop.f32.mrb[0].mxu0
          %1100 = vmatprep.mubr.f32.mxu0 0.0
          %1101 = vmatmul.mubr.f32.gmra.mrb[0].mxu0 %v945
          %v1102 = vpop.f32.mrb[0].mxu0
          %v1103 = vadd.f32 %v989, %v1102
          %v1104 = vpop.f32.mrb[0].mxu0
          %1105 = vmatprep.mubr.f32.mxu0 0.0
          %1106 = vmatmul.mubr.f32.gmra.mrb[0].mxu0 %v946
          %v1107 = vpop.f32.mrb[0].mxu0
          %v1108 = vadd.f32 %v989, %v1107
          %v1109 = vpop.f32.mrb[0].mxu0
          %1110 = vmatprep.mubr.f32.mxu0 0.0
          %1111 = vmatmul.mubr.f32.gmra.mrb[0].mxu0 %v947
          %v1112 = vpop.f32.mrb[0].mxu0
          %v1113 = vadd.f32 %v989, %v1112
          %v1114 = vpop.f32.mrb[0].mxu0
          %1115 = vmatprep.mubr.f32.mxu0 0.0
          %1116 = vmatmul.mubr.f32.gmra.mrb[0].mxu0 %v948
          %v1117 = vpop.f32.mrb[0].mxu0
          %v1118 = vadd.f32 %v989, %v1117
          %v1119 = vpop.f32.mrb[0].mxu0
          %1120 = vmatprep.mubr.f32.mxu0 0.0
          %1121 = vmatmul.mubr.f32.gmra.mrb[0].mxu0 %v949
          %v1122 = vpop.f32.mrb[0].mxu0
          %v1123 = vadd.f32 %v989, %v1122
          %v1124 = vpop.f32.mrb[0].mxu0
          %1125 = vmatprep.mubr.f32.mxu0 0.0
          %1126 = vmatmul.mubr.f32.gmra.mrb[0].mxu0 %v950
          %v1127 = vpop.f32.mrb[0].mxu0
          %v1128 = vadd.f32 %v989, %v1127
          %v1129 = vpop.f32.mrb[0].mxu0
          %1130 = vmatprep.mubr.f32.mxu0 0.0
          %1131 = vmatmul.mubr.f32.gmra.mrb[0].mxu0 %v951
          %v1132 = vpop.f32.mrb[0].mxu0
          %v1133 = vadd.f32 %v989, %v1132
          %v1134 = vpop.f32.mrb[0].mxu0
          %1135 = vdwg.mxu0
          %1136 = vst [vmem:[%s476] sm:$0xff] %v1058
          %1137 = vst [vmem:[%s476 + $0x8] sm:$0xff] %v1063
          %1138 = vst [vmem:[%s476 + $0x10] sm:$0xff] %v1068
          %1139 = vst [vmem:[%s476 + $0x18] sm:$0xff] %v1073
          %1140 = vst [vmem:[%s476 + $0x20] sm:$0xff] %v1078
          %1141 = vst [vmem:[%s476 + $0x28] sm:$0xff] %v1083
          %1142 = vst [vmem:[%s476 + $0x30] sm:$0xff] %v1088
          %1143 = vst [vmem:[%s476 + $0x38] sm:$0xff] %v1093
          %1144 = vst [vmem:[%s476 + $0x40] sm:$0xff] %v1098
          %1145 = vst [vmem:[%s476 + $0x48] sm:$0xff] %v1103
          %1146 = vst [vmem:[%s476 + $0x50] sm:$0xff] %v1108
          %1147 = vst [vmem:[%s476 + $0x58] sm:$0xff] %v1113
          %1148 = vst [vmem:[%s476 + $0x60] sm:$0xff] %v1118
          %1149 = vst [vmem:[%s476 + $0x68] sm:$0xff] %v1123
          %1150 = vst [vmem:[%s476 + $0x70] sm:$0xff] %v1128
          %1151 = vst [vmem:[%s476 + $0x78] sm:$0xff] %v1133
        $region101: #{tpu_custom_call.1} parent=80 // pred_fallthru
          _
        %s1152 = sand.u32 %s192, 1
        %s1153 = scalar_lea.sflag [#allocation6], %s1152
        %s1154 = sand.u32 %s192, 1
        %s1155 = smul.addr %s1154, 128
        %s1156 = scalar_lea.vmem [#allocation9], %s1155
        %s1157 = sand.u32 %s218, 1
        %s1158 = scalar_lea.sflag [#allocation11], %s1157
        %s1159 = sand.u32 %s218, 1
        %s1160 = smul.addr %s1159, 128
        %s1161 = scalar_lea.vmem [#allocation10], %s1160
        // Predicated region
        $region102: #{tpu_custom_call.1} parent=80 // pred_check
          %p1162 = pneg %p202
        $region103: #{tpu_custom_call.1} parent=80 // pred_check_branch
          %1164 = sbr.rel (%p1162) target = $region105
        $region104: #{tpu_custom_call.1} parent=80 // pred_region
          %s1165 = smul.u32 16, %s33
          %s1167 = ssub.s32 2048, 2048
          %1168 = vsyncadd %s1153, %s1167
          %s1169 = smul.addr %s1165, 128
          %s1170 = scalar_lea.hbm %s6, %s1169
          %s1171 = sshll.u32 %s1156, 4
          %s1172 = int_to_ptr.vmem [resolvable:$true] %s1171
          %1177 = dma.vmem_to_hbm [thread:$0]  %s1172, 2048, %s1170, %s1153, 128, 128, 8
        $region105: #{tpu_custom_call.1} parent=80 // pred_fallthru
          _
        // Predicated region
        $region106: #{tpu_custom_call.1} parent=80 // pred_check
          %p1178 = pneg %p228
        $region107: #{tpu_custom_call.1} parent=80 // pred_check_branch
          %1180 = sbr.rel (%p1178) target = $region109
        $region108: #{tpu_custom_call.1} parent=80 // pred_region
          %s1181 = smul.u32 16, %s33
          %s1183 = ssub.s32 2048, 2048
          %1184 = vsyncadd %s1158, %s1183
          %s1185 = smul.addr %s1181, 128
          %s1186 = scalar_lea.hbm %s7, %s1185
          %s1187 = sshll.u32 %s1161, 4
          %s1188 = int_to_ptr.vmem [resolvable:$true] %s1187
          %1193 = dma.vmem_to_hbm [thread:$0]  %s1188, 2048, %s1186, %s1158, 128, 128, 8
        $region109: #{tpu_custom_call.1} parent=80 // pred_fallthru
          _
      $region81: #{tpu_custom_call.1} parent=5 // pred_fallthru
        _
      %p1194 = scmp.le.s32.totalorder 2, %s24
      // Predicated region
      $region110: #{tpu_custom_call.1} parent=5 // pred_check
        %p1195 = pneg %p1194
      $region111: #{tpu_custom_call.1} parent=5 // pred_check_branch
        %1197 = sbr.rel (%p1195) target = $region113
      $region112: #{tpu_custom_call.1} parent=5 // pred_region
        %s1198 = ssub.s32 %s24, 2
        // Predicated region
        $region114: #{tpu_custom_call.1} parent=112 // pred_check
          %p1199 = pneg %p208
        $region115: #{tpu_custom_call.1} parent=112 // pred_check_branch
          %1201 = sbr.rel (%p1199) target = $region117
        $region116: #{tpu_custom_call.1} parent=112 // pred_region
          %s1202 = sand.u32 %s193, 1
          %s1203 = scalar_lea.sflag [#allocation6], %s1202
          %s1204 = sand.u32 %s193, 1
          %s1205 = smul.addr %s1204, 128
          %s1206 = scalar_lea.vmem [#allocation9], %s1205
          %1207 = dma.done %s1203, 2048
        $region117: #{tpu_custom_call.1} parent=112 // pred_fallthru
          _
        // Predicated region
        $region118: #{tpu_custom_call.1} parent=112 // pred_check
          %p1208 = pneg %p234
        $region119: #{tpu_custom_call.1} parent=112 // pred_check_branch
          %1210 = sbr.rel (%p1208) target = $region121
        $region120: #{tpu_custom_call.1} parent=112 // pred_region
          %s1211 = sand.u32 %s219, 1
          %s1212 = scalar_lea.sflag [#allocation11], %s1211
          %s1213 = sand.u32 %s219, 1
          %s1214 = smul.addr %s1213, 128
          %s1215 = scalar_lea.vmem [#allocation10], %s1214
          %1216 = dma.done %s1212, 2048
        $region121: #{tpu_custom_call.1} parent=112 // pred_fallthru
          _
      $region113: #{tpu_custom_call.1} parent=5 // pred_fallthru
        _
    $region6: #{tpu_custom_call.1} parent=1 // loop_footer
      %s28 = sadd.s32 1, %s24
    $region7: #{tpu_custom_call.1} parent=1 // loop_footer_branch
      %23 = sbr.rel target = $region3
    $region8: #{tpu_custom_call.1} parent=1 // loop_exit
      _
    %1217 = vsyncpa [#allocation5], 1
    %s1218 = scalar_lea.sflag [#allocation5], 1
    %1219 = vsyncpa %s1218, 1
    %1220 = vsyncpa [#allocation8], 1
    %1221 = vsyncpa [#allocation6], 1
    %s1222 = scalar_lea.sflag [#allocation6], 1
    %1223 = vsyncpa %s1222, 1
    %1224 = vsyncpa [#allocation11], 1
    %s1225 = scalar_lea.sflag [#allocation11], 1
    %1226 = vsyncpa %s1225, 1

</llo_original>
